<compile_context>
chip_gen: v6e
topology: v6e:2x2x1
jax: 0.10.0
libtpu: 0.0.40
codegen_flags: <defaults>
</compile_context>

<pallas_src>
import jax
import jax.numpy as jnp
from jax.experimental import pallas as pl
from jax.experimental.pallas import tpu as pltpu

# Logical (PyTorch) dims
N_IN = 54
N_MID = 100
N_OUT = 1

# Padded, tile-aligned dims
N_IN_P = 64    # input features  (sublane-friendly, == full block dim)
N_MID_P = 128  # hidden features (exact vreg lane/sublane width)
N_OUT_P = 8    # output rows     (one full sublane tile; row 0 is the real output)


def _round_up(n, m):
    return ((n + m - 1) // m) * m


def mlp_kernel(x_ref, w1_ref, b1_ref, w2_ref, b2_ref, w3_ref, b3_ref, o_ref):
    """One (N_IN_P, TB) x^T tile -> (N_OUT_P, TB) output tile.

    Matmuls run in bf16 on the MXU with f32 accumulation; bias add / ReLU in f32.
    """
    x = x_ref[...]  # bf16 (64, TB)

    h1 = jnp.dot(w1_ref[...], x, preferred_element_type=jnp.float32)      # (128, TB)
    h1 = jnp.maximum(h1 + b1_ref[...], 0.0)

    h2 = jnp.dot(w2_ref[...], h1.astype(w2_ref.dtype),
                 preferred_element_type=jnp.float32)                      # (128, TB)
    h2 = jnp.maximum(h2 + b2_ref[...], 0.0)

    out = jnp.dot(w3_ref[...], h2.astype(w3_ref.dtype),
                  preferred_element_type=jnp.float32) + b3_ref[...]       # (8, TB)
    o_ref[...] = out.astype(o_ref.dtype)


def mynn_forward(x, packed_params, *, tb=1024):
    """x: (B, N_IN) float32.  packed_params: padded params from pack_params()."""
    w1, b1, w2, b2, w3, b3 = packed_params
    B = x.shape[0]

    # Batch tile: multiple of 128 (lane width), capped at `tb`.
    tb = min(tb, _round_up(B, 128))
    B_pad = _round_up(B, tb)
    grid = (B_pad // tb,)

    # Zero-pad + transpose x to (features, batch); cast to bf16 (halves DMA bytes).
    x_t = jnp.zeros((N_IN_P, B_pad), jnp.bfloat16)
    x_t = x_t.at[:N_IN, :B].set(x.T.astype(jnp.bfloat16))

    # Weights/biases: constant index_map -> DMA'd once, VMEM-resident across tiles.
    def const(shape):
        return pl.BlockSpec(shape, lambda i: (0, 0))

    out_t = pl.pallas_call(
        mlp_kernel,
        out_shape=jax.ShapeDtypeStruct((N_OUT_P, B_pad), jnp.float32),
        grid=grid,
        in_specs=[
            pl.BlockSpec((N_IN_P, tb), lambda i: (0, i)),   # x^T: tiled over batch
            const((N_MID_P, N_IN_P)),                       # w1 (out, in)
            const((N_MID_P, 1)),                            # b1 (column)
            const((N_MID_P, N_MID_P)),                      # w2
            const((N_MID_P, 1)),                            # b2
            const((N_OUT_P, N_MID_P)),                      # w3
            const((N_OUT_P, 1)),                            # b3
        ],
        out_specs=pl.BlockSpec((N_OUT_P, tb), lambda i: (0, i)),
        compiler_params=pltpu.CompilerParams(
            dimension_semantics=("parallel",),  # megacore sharding over batch tiles
        ),
    )(x_t, w1, b1, w2, b2, w3, b3)

    # Row 0 holds the real output; wrapper-side slice/reshape is layout plumbing.
    return out_t[0, :B].reshape(B, N_OUT)


def init_params(key):
    """Unpadded f32 params in PyTorch nn.Linear layout: W (out, in), b (out,)."""
    ks = jax.random.split(key, 6)

    def linear(kw, kb, fan_in, fan_out):
        bound = 1.0 / jnp.sqrt(jnp.float32(fan_in))
        w = jax.random.uniform(kw, (fan_out, fan_in), jnp.float32, -bound, bound)
        b = jax.random.uniform(kb, (fan_out,), jnp.float32, -bound, bound)
        return w, b

    w1, b1 = linear(ks[0], ks[1], N_IN, N_MID)
    w2, b2 = linear(ks[2], ks[3], N_MID, N_MID)
    w3, b3 = linear(ks[4], ks[5], N_MID, N_OUT)
    return (w1, b1, w2, b2, w3, b3)


def pack_params(params):
    """Zero-pad to tile-aligned shapes; weights -> bf16, biases stay f32 columns."""
    w1, b1, w2, b2, w3, b3 = params

    def padw(a, rows, cols):
        out = jnp.zeros((rows, cols), jnp.float32)
        return out.at[: a.shape[0], : a.shape[1]].set(a).astype(jnp.bfloat16)

    def padb(a, rows):
        out = jnp.zeros((rows, 1), jnp.float32)
        return out.at[: a.shape[0], 0].set(a)

    return (padw(w1, N_MID_P, N_IN_P), padb(b1, N_MID_P),
            padw(w2, N_MID_P, N_MID_P), padb(b2, N_MID_P),
            padw(w3, N_OUT_P, N_MID_P), padb(b3, N_OUT_P))


def reference_forward(x, params):
    """Pure-JAX reference using the same bf16-operand / f32-accumulate recipe."""
    w1, b1, w2, b2, w3, b3 = params
    bf = jnp.bfloat16
    h1 = jnp.maximum(
        jnp.dot(x.astype(bf), w1.astype(bf).T, preferred_element_type=jnp.float32) + b1, 0.0)
    h2 = jnp.maximum(
        jnp.dot(h1.astype(bf), w2.astype(bf).T, preferred_element_type=jnp.float32) + b2, 0.0)
    return jnp.dot(h2.astype(bf), w3.astype(bf).T, preferred_element_type=jnp.float32) + b3


if __name__ == "__main__":
    key = jax.random.PRNGKey(0)
    k_x, k_p = jax.random.split(key)

    params = init_params(k_p)
    packed = pack_params(params)

    # Small batch (spec-sized example).
    B = 8
    x = jax.random.normal(k_x, (B, N_IN), dtype=jnp.float32)
    out = jax.block_until_ready(mynn_forward(x, packed))
    ref = reference_forward(x, params)
    assert out.shape == (B, N_OUT)
    assert jnp.allclose(out, ref, atol=2e-2, rtol=2e-2)

    # Larger, non-tile-multiple batch: exercises batch padding and the grid.
    B2 = 1000
    x2 = jax.random.normal(jax.random.PRNGKey(1), (B2, N_IN), dtype=jnp.float32)
    out2 = jax.block_until_ready(mynn_forward(x2, packed))
    ref2 = reference_forward(x2, params)
    assert out2.shape == (B2, N_OUT)
    assert jnp.allclose(out2, ref2, atol=2e-2, rtol=2e-2)

    print("KERNEL_OK")
</pallas_src>

<mosaic_0001>
module attributes {stable_mosaic.version = 11 : i64} {
  func.func @mlp_kernel(%arg0: i32, %arg1: memref<64x128xbf16, #tpu.memory_space<vmem>>, %arg2: memref<128x64xbf16, #tpu.memory_space<vmem>>, %arg3: memref<128x1xf32, #tpu.memory_space<vmem>>, %arg4: memref<128x128xbf16, #tpu.memory_space<vmem>>, %arg5: memref<128x1xf32, #tpu.memory_space<vmem>>, %arg6: memref<8x128xbf16, #tpu.memory_space<vmem>>, %arg7: memref<8x1xf32, #tpu.memory_space<vmem>>, %arg8: memref<8x128xf32, #tpu.memory_space<vmem>>) attributes {dimension_semantics = [#tpu.dimension_semantics<parallel>], iteration_bounds = array<i64: 1>, scalar_prefetch = 0 : i64, scratch_operands = 0 : i64, tpu.core_type = #tpu.core_type<tc>, window_params = [{transform_indices = @transform_0, window_bounds = array<i64: 64, 128>}, {pipeline_mode = #tpu.pipeline_mode<synchronous>, transform_indices = @transform_1, window_bounds = array<i64: 128, 64>}, {pipeline_mode = #tpu.pipeline_mode<synchronous>, transform_indices = @transform_2, window_bounds = array<i64: 128, 1>}, {pipeline_mode = #tpu.pipeline_mode<synchronous>, transform_indices = @transform_3, window_bounds = array<i64: 128, 128>}, {pipeline_mode = #tpu.pipeline_mode<synchronous>, transform_indices = @transform_4, window_bounds = array<i64: 128, 1>}, {pipeline_mode = #tpu.pipeline_mode<synchronous>, transform_indices = @transform_5, window_bounds = array<i64: 8, 128>}, {pipeline_mode = #tpu.pipeline_mode<synchronous>, transform_indices = @transform_6, window_bounds = array<i64: 8, 1>}, {transform_indices = @transform_7, window_bounds = array<i64: 8, 128>}]} {
    %c0 = arith.constant 0 : index
    %c0_0 = arith.constant 0 : index
    %0 = vector.load %arg1[%c0, %c0_0] : memref<64x128xbf16, #tpu.memory_space<vmem>>, vector<64x128xbf16>
    %c0_1 = arith.constant 0 : index
    %c0_2 = arith.constant 0 : index
    %1 = vector.load %arg2[%c0_1, %c0_2] : memref<128x64xbf16, #tpu.memory_space<vmem>>, vector<128x64xbf16>
    %cst = arith.constant dense<0.000000e+00> : vector<128x128xf32>
    %2 = tpu.matmul %1, %0, %cst {dimension_numbers = #tpu.dot_dimension_numbers<[1], [0], [0], [1], [0, 0, 1, 1], [], []>} : vector<128x64xbf16>, vector<64x128xbf16>, vector<128x128xf32> -> vector<128x128xf32>
    %c0_3 = arith.constant 0 : index
    %c0_4 = arith.constant 0 : index
    %3 = vector.load %arg3[%c0_3, %c0_4] : memref<128x1xf32, #tpu.memory_space<vmem>>, vector<128x1xf32>
    %4 = vector.broadcast %3 : vector<128x1xf32> to vector<128x128xf32>
    %5 = arith.addf %2, %4 : vector<128x128xf32>
    %cst_5 = arith.constant 0.000000e+00 : f32
    %6 = vector.broadcast %cst_5 : f32 to vector<128x128xf32>
    %7 = arith.maximumf %5, %6 : vector<128x128xf32>
    %c0_6 = arith.constant 0 : index
    %c0_7 = arith.constant 0 : index
    %8 = vector.load %arg4[%c0_6, %c0_7] : memref<128x128xbf16, #tpu.memory_space<vmem>>, vector<128x128xbf16>
    %9 = arith.truncf %7 : vector<128x128xf32> to vector<128x128xbf16>
    %cst_8 = arith.constant dense<0.000000e+00> : vector<128x128xf32>
    %10 = tpu.matmul %8, %9, %cst_8 {dimension_numbers = #tpu.dot_dimension_numbers<[1], [0], [0], [1], [0, 0, 1, 1], [], []>} : vector<128x128xbf16>, vector<128x128xbf16>, vector<128x128xf32> -> vector<128x128xf32>
    %c0_9 = arith.constant 0 : index
    %c0_10 = arith.constant 0 : index
    %11 = vector.load %arg5[%c0_9, %c0_10] : memref<128x1xf32, #tpu.memory_space<vmem>>, vector<128x1xf32>
    %12 = vector.broadcast %11 : vector<128x1xf32> to vector<128x128xf32>
    %13 = arith.addf %10, %12 : vector<128x128xf32>
    %cst_11 = arith.constant 0.000000e+00 : f32
    %14 = vector.broadcast %cst_11 : f32 to vector<128x128xf32>
    %15 = arith.maximumf %13, %14 : vector<128x128xf32>
    %c0_12 = arith.constant 0 : index
    %c0_13 = arith.constant 0 : index
    %16 = vector.load %arg6[%c0_12, %c0_13] : memref<8x128xbf16, #tpu.memory_space<vmem>>, vector<8x128xbf16>
    %17 = arith.truncf %15 : vector<128x128xf32> to vector<128x128xbf16>
    %cst_14 = arith.constant dense<0.000000e+00> : vector<8x128xf32>
    %18 = tpu.matmul %16, %17, %cst_14 {dimension_numbers = #tpu.dot_dimension_numbers<[1], [0], [0], [1], [0, 0, 1, 1], [], []>} : vector<8x128xbf16>, vector<128x128xbf16>, vector<8x128xf32> -> vector<8x128xf32>
    %c0_15 = arith.constant 0 : index
    %c0_16 = arith.constant 0 : index
    %19 = vector.load %arg7[%c0_15, %c0_16] : memref<8x1xf32, #tpu.memory_space<vmem>>, vector<8x1xf32>
    %20 = vector.broadcast %19 : vector<8x1xf32> to vector<8x128xf32>
    %21 = arith.addf %18, %20 : vector<8x128xf32>
    %c0_17 = arith.constant 0 : index
    %c0_18 = arith.constant 0 : index
    %22 = vector.load %arg8[%c0_17, %c0_18] : memref<8x128xf32, #tpu.memory_space<vmem>>, vector<8x128xf32>
    tpu.vector_store %arg8[%c0_17, %c0_18], %21 {strides = array<i32>} : memref<8x128xf32, #tpu.memory_space<vmem>>, vector<8x128xf32>,
    return
  }
  func.func @transform_0(%arg0: i32) -> (i32, i32) {
    %c0_i32 = arith.constant 0 : i32
    %c0_i32_0 = arith.constant 0 : i32
    return %c0_i32, %arg0 : i32, i32
  }
  func.func @transform_1(%arg0: i32) -> (i32, i32) {
    %c0_i32 = arith.constant 0 : i32
    %c0_i32_0 = arith.constant 0 : i32
    %c0_i32_1 = arith.constant 0 : i32
    return %c0_i32, %c0_i32_0 : i32, i32
  }
  func.func @transform_2(%arg0: i32) -> (i32, i32) {
    %c0_i32 = arith.constant 0 : i32
    %c0_i32_0 = arith.constant 0 : i32
    %c0_i32_1 = arith.constant 0 : i32
    return %c0_i32, %c0_i32_0 : i32, i32
  }
  func.func @transform_3(%arg0: i32) -> (i32, i32) {
    %c0_i32 = arith.constant 0 : i32
    %c0_i32_0 = arith.constant 0 : i32
    %c0_i32_1 = arith.constant 0 : i32
    return %c0_i32, %c0_i32_0 : i32, i32
  }
  func.func @transform_4(%arg0: i32) -> (i32, i32) {
    %c0_i32 = arith.constant 0 : i32
    %c0_i32_0 = arith.constant 0 : i32
    %c0_i32_1 = arith.constant 0 : i32
    return %c0_i32, %c0_i32_0 : i32, i32
  }
  func.func @transform_5(%arg0: i32) -> (i32, i32) {
    %c0_i32 = arith.constant 0 : i32
    %c0_i32_0 = arith.constant 0 : i32
    %c0_i32_1 = arith.constant 0 : i32
    return %c0_i32, %c0_i32_0 : i32, i32
  }
  func.func @transform_6(%arg0: i32) -> (i32, i32) {
    %c0_i32 = arith.constant 0 : i32
    %c0_i32_0 = arith.constant 0 : i32
    %c0_i32_1 = arith.constant 0 : i32
    return %c0_i32, %c0_i32_0 : i32, i32
  }
  func.func @transform_7(%arg0: i32) -> (i32, i32) {
    %c0_i32 = arith.constant 0 : i32
    %c0_i32_0 = arith.constant 0 : i32
    return %c0_i32, %arg0 : i32, i32
  }
}

</mosaic_0001>

<llo_original>
// kernel: tpu_custom_call.1
$region0: #{tpu_custom_call.1}
  #allocation0 [shape = 'u32[]', space=smem, size = 0x4, offset = 0x4, fixed_abs, tag = 'smem constant byte address 0x4 - core index']
  #allocation1 [shape = 'u32[144,128]{1,0:T(1,128)}', space=vmem, size = 0x12000, scoped, tag = 'internal scratch']
  %s0 = inlined_call_operand.vmem [shape: bf16[64,128], index: 0, kind: input, shape index: {}]
  %s1 = inlined_call_operand.vmem [shape: bf16[128,64], index: 1, kind: input, shape index: {}]
  %s2 = inlined_call_operand.vmem [shape: f32[128,1], index: 2, kind: input, shape index: {}]
  %s3 = inlined_call_operand.vmem [shape: bf16[128,128], index: 3, kind: input, shape index: {}]
  %s4 = inlined_call_operand.vmem [shape: f32[128,1], index: 4, kind: input, shape index: {}]
  %s5 = inlined_call_operand.vmem [shape: bf16[8,128], index: 5, kind: input, shape index: {}]
  %s6 = inlined_call_operand.vmem [shape: f32[8,1], index: 6, kind: input, shape index: {}]
  %s7 = inlined_call_operand.hbm [shape: f32[8,128], index: 7, kind: output, shape index: {}]
  %s8 = sld [smem:[#allocation0]]
  $region38: #{tpu_custom_call.1} parent=0
    _
  %s10 = ssub.s32 1, %s8
  %s11 = scalar_select 0, %s10, %s8
  $region1: #{tpu_custom_call.1} parent=0
    #allocation2 [shape = 'u8[4096]{0}', space=vmem, size = 0x1000, scoped, tag = 'output window, operand 0, single buffered']
    #allocation3 [shape = 's32[1]{0}', space=sflag, size = 0x4, scoped, tag = 'scoped memory for tpu_custom_call.1']
    %12 = vsyncpa [#allocation3], 0
    // Predicated region
    $region2: #{tpu_custom_call.1} parent=1 // pred_check
      _
    $region3: #{tpu_custom_call.1} parent=1 // pred_check_branch
      %14 = sbr.rel (0) target = $region5
    $region4: #{tpu_custom_call.1} parent=1 // pred_region
      _
    $region5: #{tpu_custom_call.1} parent=1 // pred_fallthru
      _
    // Predicated region
    $region6: #{tpu_custom_call.1} parent=1 // pred_check
      _
    $region7: #{tpu_custom_call.1} parent=1 // pred_check_branch
      %16 = sbr.rel (0) target = $region9
    $region8: #{tpu_custom_call.1} parent=1 // pred_region
      _
    $region9: #{tpu_custom_call.1} parent=1 // pred_fallthru
      _
    // Predicated region
    $region10: #{tpu_custom_call.1} parent=1 // pred_check
      _
    $region11: #{tpu_custom_call.1} parent=1 // pred_check_branch
      %18 = sbr.rel (0) target = $region13
    $region12: #{tpu_custom_call.1} parent=1 // pred_region
      _
    $region13: #{tpu_custom_call.1} parent=1 // pred_fallthru
      _
    // Predicated region
    $region14: #{tpu_custom_call.1} parent=1 // pred_check
      _
    $region15: #{tpu_custom_call.1} parent=1 // pred_check_branch
      %20 = sbr.rel (0) target = $region17
    $region16: #{tpu_custom_call.1} parent=1 // pred_region
      _
    $region17: #{tpu_custom_call.1} parent=1 // pred_fallthru
      _
    // Predicated region
    $region18: #{tpu_custom_call.1} parent=1 // pred_check
      _
    $region19: #{tpu_custom_call.1} parent=1 // pred_check_branch
      %22 = sbr.rel (0) target = $region21
    $region20: #{tpu_custom_call.1} parent=1 // pred_region
      _
    $region21: #{tpu_custom_call.1} parent=1 // pred_fallthru
      _
    // Predicated region
    $region22: #{tpu_custom_call.1} parent=1 // pred_check
      _
    $region23: #{tpu_custom_call.1} parent=1 // pred_check_branch
      %24 = sbr.rel (0) target = $region25
    $region24: #{tpu_custom_call.1} parent=1 // pred_region
      _
    $region25: #{tpu_custom_call.1} parent=1 // pred_fallthru
      _
    // Predicated region
    $region26: #{tpu_custom_call.1} parent=1 // pred_check
      _
    $region27: #{tpu_custom_call.1} parent=1 // pred_check_branch
      %26 = sbr.rel (0) target = $region29
    $region28: #{tpu_custom_call.1} parent=1 // pred_region
      _
    $region29: #{tpu_custom_call.1} parent=1 // pred_fallthru
      _
    %v28 = vld [vmem:[%s0] sm:$0xf]
    %v29 = vld [vmem:[%s0 + $0x4] sm:$0xf]
    %v30 = vld [vmem:[%s0 + $0x8] sm:$0xf]
    %v31 = vld [vmem:[%s0 + $0xc] sm:$0xf]
    %v32 = vld [vmem:[%s0 + $0x10] sm:$0xf]
    %v33 = vld [vmem:[%s0 + $0x14] sm:$0xf]
    %v34 = vld [vmem:[%s0 + $0x18] sm:$0xf]
    %v35 = vld [vmem:[%s0 + $0x1c] sm:$0xf]
    %v36 = vld [vmem:[%s1] sm:$0xf]
    %v37 = vld [vmem:[%s1 + $0x4] sm:$0xf]
    %v38 = vld [vmem:[%s1 + $0x8] sm:$0xf]
    %v39 = vld [vmem:[%s1 + $0xc] sm:$0xf]
    %v40 = vld [vmem:[%s1 + $0x10] sm:$0xf]
    %v41 = vld [vmem:[%s1 + $0x14] sm:$0xf]
    %v42 = vld [vmem:[%s1 + $0x18] sm:$0xf]
    %v43 = vld [vmem:[%s1 + $0x1c] sm:$0xf]
    %v44 = vld [vmem:[%s1 + $0x20] sm:$0xf]
    %v45 = vld [vmem:[%s1 + $0x24] sm:$0xf]
    %v46 = vld [vmem:[%s1 + $0x28] sm:$0xf]
    %v47 = vld [vmem:[%s1 + $0x2c] sm:$0xf]
    %v48 = vld [vmem:[%s1 + $0x30] sm:$0xf]
    %v49 = vld [vmem:[%s1 + $0x34] sm:$0xf]
    %v50 = vld [vmem:[%s1 + $0x38] sm:$0xf]
    %v51 = vld [vmem:[%s1 + $0x3c] sm:$0xf]
    %v52 = vld [vmem:[%s2] sm:$0xff]
    %v53 = vld [vmem:[%s2 + $0x8] sm:$0xff]
    %v54 = vld [vmem:[%s2 + $0x10] sm:$0xff]
    %v55 = vld [vmem:[%s2 + $0x18] sm:$0xff]
    %v56 = vld [vmem:[%s2 + $0x20] sm:$0xff]
    %v57 = vld [vmem:[%s2 + $0x28] sm:$0xff]
    %v58 = vld [vmem:[%s2 + $0x30] sm:$0xff]
    %v59 = vld [vmem:[%s2 + $0x38] sm:$0xff]
    %v60 = vld [vmem:[%s2 + $0x40] sm:$0xff]
    %v61 = vld [vmem:[%s2 + $0x48] sm:$0xff]
    %v62 = vld [vmem:[%s2 + $0x50] sm:$0xff]
    %v63 = vld [vmem:[%s2 + $0x58] sm:$0xff]
    %v64 = vld [vmem:[%s2 + $0x60] sm:$0xff]
    %v65 = vld [vmem:[%s2 + $0x68] sm:$0xff]
    %v66 = vld [vmem:[%s2 + $0x70] sm:$0xff]
    %v67 = vld [vmem:[%s2 + $0x78] sm:$0xff]
    %69 = vset.pattern.permute.xlu0 0
    %70 = vperm.xlu0 %69, %v52
    %v71 = vpop.permute.xlu0 %70
    %74 = vset.pattern.permute.xlu0 0
    %75 = vperm.xlu0 %74, %v53
    %v76 = vpop.permute.xlu0 %75
    %79 = vset.pattern.permute.xlu0 0
    %80 = vperm.xlu0 %79, %v54
    %v81 = vpop.permute.xlu0 %80
    %84 = vset.pattern.permute.xlu0 0
    %85 = vperm.xlu0 %84, %v55
    %v86 = vpop.permute.xlu0 %85
    %89 = vset.pattern.permute.xlu0 0
    %90 = vperm.xlu0 %89, %v56
    %v91 = vpop.permute.xlu0 %90
    %94 = vset.pattern.permute.xlu0 0
    %95 = vperm.xlu0 %94, %v57
    %v96 = vpop.permute.xlu0 %95
    %99 = vset.pattern.permute.xlu0 0
    %100 = vperm.xlu0 %99, %v58
    %v101 = vpop.permute.xlu0 %100
    %104 = vset.pattern.permute.xlu0 0
    %105 = vperm.xlu0 %104, %v59
    %v106 = vpop.permute.xlu0 %105
    %109 = vset.pattern.permute.xlu0 0
    %110 = vperm.xlu0 %109, %v60
    %v111 = vpop.permute.xlu0 %110
    %114 = vset.pattern.permute.xlu0 0
    %115 = vperm.xlu0 %114, %v61
    %v116 = vpop.permute.xlu0 %115
    %119 = vset.pattern.permute.xlu0 0
    %120 = vperm.xlu0 %119, %v62
    %v121 = vpop.permute.xlu0 %120
    %124 = vset.pattern.permute.xlu0 0
    %125 = vperm.xlu0 %124, %v63
    %v126 = vpop.permute.xlu0 %125
    %129 = vset.pattern.permute.xlu0 0
    %130 = vperm.xlu0 %129, %v64
    %v131 = vpop.permute.xlu0 %130
    %134 = vset.pattern.permute.xlu0 0
    %135 = vperm.xlu0 %134, %v65
    %v136 = vpop.permute.xlu0 %135
    %139 = vset.pattern.permute.xlu0 0
    %140 = vperm.xlu0 %139, %v66
    %v141 = vpop.permute.xlu0 %140
    %144 = vset.pattern.permute.xlu0 0
    %145 = vperm.xlu0 %144, %v67
    %v146 = vpop.permute.xlu0 %145
    %v164 = vunpack.c.l.b16 %v36
    %v165 = vunpack.c.l.b16 %v37
    %v166 = vunpack.c.l.b16 %v38
    %v167 = vunpack.c.l.b16 %v39
    %v168 = vunpack.c.l.b16 %v40
    %v169 = vunpack.c.l.b16 %v41
    %v170 = vunpack.c.l.b16 %v42
    %v171 = vunpack.c.l.b16 %v43
    %v172 = vunpack.c.l.b16 %v44
    %v173 = vunpack.c.l.b16 %v45
    %v174 = vunpack.c.l.b16 %v46
    %v175 = vunpack.c.l.b16 %v47
    %v176 = vunpack.c.l.b16 %v48
    %v177 = vunpack.c.l.b16 %v49
    %v178 = vunpack.c.l.b16 %v50
    %v179 = vunpack.c.l.b16 %v51
    %v180 = vpack.c.b16 %v165, %v164
    %v181 = vpack.c.b16 %v167, %v166
    %v182 = vpack.c.b16 %v169, %v168
    %v183 = vpack.c.b16 %v171, %v170
    %v184 = vpack.c.b16 %v173, %v172
    %v185 = vpack.c.b16 %v175, %v174
    %v186 = vpack.c.b16 %v177, %v176
    %v187 = vpack.c.b16 %v179, %v178
    %v196 = vunpack.c.l.b16 %v28
    %v197 = vunpack.c.l.b16 %v29
    %v198 = vunpack.c.l.b16 %v30
    %v199 = vunpack.c.l.b16 %v31
    %v200 = vunpack.c.l.b16 %v32
    %v201 = vunpack.c.l.b16 %v33
    %v202 = vunpack.c.l.b16 %v34
    %v203 = vunpack.c.l.b16 %v35
    %v204 = vpack.c.b16 %v197, %v196
    %v205 = vpack.c.b16 %v199, %v198
    %v206 = vpack.c.b16 %v201, %v200
    %v207 = vpack.c.b16 %v203, %v202
    %vm212 = vcmask 523264
    %v214 = vsel %vm212, %v180, 0
    %v217 = vsel %vm212, %v181, 0
    %v220 = vsel %vm212, %v182, 0
    %v223 = vsel %vm212, %v183, 0
    %v226 = vsel %vm212, %v184, 0
    %v229 = vsel %vm212, %v185, 0
    %v232 = vsel %vm212, %v186, 0
    %v235 = vsel %vm212, %v187, 0
    %237 = vmatprep.subr.bf16.mxu0 0
    %238 = vmatpush1.bf16.msra.mxu0 0
    %239 = vmatprep.subr.bf16.mxu0 0
    %240 = vmatpush1.bf16.msra.mxu0 0
    %241 = vmatprep.subr.bf16.mxu0 0
    %242 = vmatpush1.bf16.msra.mxu0 0
    %243 = vmatprep.subr.bf16.mxu0 0
    %244 = vmatpush1.bf16.msra.mxu0 0
    %245 = vmatprep.subr.bf16.mxu0 0
    %246 = vmatpush1.bf16.msra.mxu0 %v207
    %247 = vmatprep.subr.bf16.mxu0 0
    %248 = vmatpush1.bf16.msra.mxu0 %v206
    %249 = vmatprep.subr.bf16.mxu0 0
    %250 = vmatpush1.bf16.msra.mxu0 %v205
    %251 = vmatprep.subr.bf16.mxu0 0
    %252 = vmatpush1.bf16.msra.mxu0 %v204
    %253 = vmatprep.subr.bf16.mxu0 0
    %254 = vmatpush2.bf16.msra.mxu0 0
    %255 = vmatprep.subr.bf16.mxu0 0
    %256 = vmatpush2.bf16.msra.mxu0 0
    %257 = vmatprep.subr.bf16.mxu0 0
    %258 = vmatpush2.bf16.msra.mxu0 0
    %259 = vmatprep.subr.bf16.mxu0 0
    %260 = vmatpush2.bf16.msra.mxu0 0
    %261 = vmatprep.subr.bf16.mxu0 0
    %262 = vmatpush2.bf16.msra.mxu0 0
    %263 = vmatprep.subr.bf16.mxu0 0
    %264 = vmatpush2.bf16.msra.mxu0 0
    %265 = vmatprep.subr.bf16.mxu0 0
    %266 = vmatpush2.bf16.msra.mxu0 0
    %267 = vmatprep.subr.bf16.mxu0 0
    %268 = vmatpush2.bf16.msra.mxu0 0
    %269 = vmatprep.mubr.bf16.mxu0 0
    %270 = vmatmul.mubr.bf16.gmra.mxu0 %v214
    %v271 = vpop.f32.mrf.mxu0
    %v272 = vadd.f32 %v71, %v271
    %v273 = vpop.f32.mrf.mxu0
    %v274 = vpop.f32.mrf.mxu0
    %v275 = vadd.f32 %v76, %v274
    %v276 = vpop.f32.mrf.mxu0
    %277 = vmatprep.mubr.bf16.mxu0 0
    %278 = vmatmul.mubr.bf16.gmra.mxu0 %v217
    %v279 = vpop.f32.mrf.mxu0
    %v280 = vadd.f32 %v81, %v279
    %v281 = vpop.f32.mrf.mxu0
    %v282 = vpop.f32.mrf.mxu0
    %v283 = vadd.f32 %v86, %v282
    %v284 = vpop.f32.mrf.mxu0
    %285 = vmatprep.mubr.bf16.mxu0 0
    %286 = vmatmul.mubr.bf16.gmra.mxu0 %v220
    %v287 = vpop.f32.mrf.mxu0
    %v288 = vadd.f32 %v91, %v287
    %v289 = vpop.f32.mrf.mxu0
    %v290 = vpop.f32.mrf.mxu0
    %v291 = vadd.f32 %v96, %v290
    %v292 = vpop.f32.mrf.mxu0
    %293 = vmatprep.mubr.bf16.mxu0 0
    %294 = vmatmul.mubr.bf16.gmra.mxu0 %v223
    %v295 = vpop.f32.mrf.mxu0
    %v296 = vadd.f32 %v101, %v295
    %v297 = vpop.f32.mrf.mxu0
    %v298 = vpop.f32.mrf.mxu0
    %v299 = vadd.f32 %v106, %v298
    %v300 = vpop.f32.mrf.mxu0
    %301 = vmatprep.mubr.bf16.mxu0 0
    %302 = vmatmul.mubr.bf16.gmra.mxu0 %v226
    %v303 = vpop.f32.mrf.mxu0
    %v304 = vadd.f32 %v111, %v303
    %v305 = vpop.f32.mrf.mxu0
    %v306 = vpop.f32.mrf.mxu0
    %v307 = vadd.f32 %v116, %v306
    %v308 = vpop.f32.mrf.mxu0
    %309 = vmatprep.mubr.bf16.mxu0 0
    %310 = vmatmul.mubr.bf16.gmra.mxu0 %v229
    %v311 = vpop.f32.mrf.mxu0
    %v312 = vadd.f32 %v121, %v311
    %v313 = vpop.f32.mrf.mxu0
    %v314 = vpop.f32.mrf.mxu0
    %v315 = vadd.f32 %v126, %v314
    %v316 = vpop.f32.mrf.mxu0
    %317 = vmatprep.mubr.bf16.mxu0 0
    %318 = vmatmul.mubr.bf16.gmra.mxu0 %v232
    %v319 = vpop.f32.mrf.mxu0
    %v320 = vadd.f32 %v131, %v319
    %v321 = vpop.f32.mrf.mxu0
    %v322 = vpop.f32.mrf.mxu0
    %v323 = vadd.f32 %v136, %v322
    %v324 = vpop.f32.mrf.mxu0
    %325 = vmatprep.mubr.bf16.mxu0 0
    %326 = vmatmul.mubr.bf16.gmra.mxu0 %v235
    %v327 = vpop.f32.mrf.mxu0
    %v328 = vadd.f32 %v141, %v327
    %v329 = vpop.f32.mrf.mxu0
    %v330 = vpop.f32.mrf.mxu0
    %v331 = vadd.f32 %v146, %v330
    %v332 = vpop.f32.mrf.mxu0
    %333 = vdwg.mxu0
    %v334 = vmax.f32 %v272, 0.0
    %v335 = vmax.f32 %v275, 0.0
    %v336 = vmax.f32 %v280, 0.0
    %v337 = vmax.f32 %v283, 0.0
    %v338 = vmax.f32 %v288, 0.0
    %v339 = vmax.f32 %v291, 0.0
    %v340 = vmax.f32 %v296, 0.0
    %v341 = vmax.f32 %v299, 0.0
    %v342 = vmax.f32 %v304, 0.0
    %v343 = vmax.f32 %v307, 0.0
    %v344 = vmax.f32 %v312, 0.0
    %v345 = vmax.f32 %v315, 0.0
    %v346 = vmax.f32 %v320, 0.0
    %v347 = vmax.f32 %v323, 0.0
    %v348 = vmax.f32 %v328, 0.0
    %v349 = vmax.f32 %v331, 0.0
    %v350 = vld [vmem:[%s3] sm:$0xf]
    %v351 = vld [vmem:[%s3 + $0x4] sm:$0xf]
    %v352 = vld [vmem:[%s3 + $0x8] sm:$0xf]
    %v353 = vld [vmem:[%s3 + $0xc] sm:$0xf]
    %v354 = vld [vmem:[%s3 + $0x10] sm:$0xf]
    %v355 = vld [vmem:[%s3 + $0x14] sm:$0xf]
    %v356 = vld [vmem:[%s3 + $0x18] sm:$0xf]
    %v357 = vld [vmem:[%s3 + $0x1c] sm:$0xf]
    %v358 = vld [vmem:[%s3 + $0x20] sm:$0xf]
    %v359 = vld [vmem:[%s3 + $0x24] sm:$0xf]
    %v360 = vld [vmem:[%s3 + $0x28] sm:$0xf]
    %v361 = vld [vmem:[%s3 + $0x2c] sm:$0xf]
    %v362 = vld [vmem:[%s3 + $0x30] sm:$0xf]
    %v363 = vld [vmem:[%s3 + $0x34] sm:$0xf]
    %v364 = vld [vmem:[%s3 + $0x38] sm:$0xf]
    %v365 = vld [vmem:[%s3 + $0x3c] sm:$0xf]
    %v366 = vpack.c.bf16 %v335, %v334
    %v367 = vpack.c.bf16 %v337, %v336
    %v368 = vpack.c.bf16 %v339, %v338
    %v369 = vpack.c.bf16 %v341, %v340
    %v370 = vpack.c.bf16 %v343, %v342
    %v371 = vpack.c.bf16 %v345, %v344
    %v372 = vpack.c.bf16 %v347, %v346
    %v373 = vpack.c.bf16 %v349, %v348
    %v374 = vld [vmem:[%s4] sm:$0xff]
    %v375 = vld [vmem:[%s4 + $0x8] sm:$0xff]
    %v376 = vld [vmem:[%s4 + $0x10] sm:$0xff]
    %v377 = vld [vmem:[%s4 + $0x18] sm:$0xff]
    %v378 = vld [vmem:[%s4 + $0x20] sm:$0xff]
    %v379 = vld [vmem:[%s4 + $0x28] sm:$0xff]
    %v380 = vld [vmem:[%s4 + $0x30] sm:$0xff]
    %v381 = vld [vmem:[%s4 + $0x38] sm:$0xff]
    %v382 = vld [vmem:[%s4 + $0x40] sm:$0xff]
    %v383 = vld [vmem:[%s4 + $0x48] sm:$0xff]
    %v384 = vld [vmem:[%s4 + $0x50] sm:$0xff]
    %v385 = vld [vmem:[%s4 + $0x58] sm:$0xff]
    %v386 = vld [vmem:[%s4 + $0x60] sm:$0xff]
    %v387 = vld [vmem:[%s4 + $0x68] sm:$0xff]
    %v388 = vld [vmem:[%s4 + $0x70] sm:$0xff]
    %v389 = vld [vmem:[%s4 + $0x78] sm:$0xff]
    %391 = vset.pattern.permute.xlu0 0
    %392 = vperm.xlu0 %391, %v374
    %v393 = vpop.permute.xlu0 %392
    %396 = vset.pattern.permute.xlu0 0
    %397 = vperm.xlu0 %396, %v375
    %v398 = vpop.permute.xlu0 %397
    %401 = vset.pattern.permute.xlu0 0
    %402 = vperm.xlu0 %401, %v376
    %v403 = vpop.permute.xlu0 %402
    %406 = vset.pattern.permute.xlu0 0
    %407 = vperm.xlu0 %406, %v377
    %v408 = vpop.permute.xlu0 %407
    %411 = vset.pattern.permute.xlu0 0
    %412 = vperm.xlu0 %411, %v378
    %v413 = vpop.permute.xlu0 %412
    %416 = vset.pattern.permute.xlu0 0
    %417 = vperm.xlu0 %416, %v379
    %v418 = vpop.permute.xlu0 %417
    %421 = vset.pattern.permute.xlu0 0
    %422 = vperm.xlu0 %421, %v380
    %v423 = vpop.permute.xlu0 %422
    %426 = vset.pattern.permute.xlu0 0
    %427 = vperm.xlu0 %426, %v381
    %v428 = vpop.permute.xlu0 %427
    %431 = vset.pattern.permute.xlu0 0
    %432 = vperm.xlu0 %431, %v382
    %v433 = vpop.permute.xlu0 %432
    %436 = vset.pattern.permute.xlu0 0
    %437 = vperm.xlu0 %436, %v383
    %v438 = vpop.permute.xlu0 %437
    %441 = vset.pattern.permute.xlu0 0
    %442 = vperm.xlu0 %441, %v384
    %v443 = vpop.permute.xlu0 %442
    %446 = vset.pattern.permute.xlu0 0
    %447 = vperm.xlu0 %446, %v385
    %v448 = vpop.permute.xlu0 %447
    %451 = vset.pattern.permute.xlu0 0
    %452 = vperm.xlu0 %451, %v386
    %v453 = vpop.permute.xlu0 %452
    %456 = vset.pattern.permute.xlu0 0
    %457 = vperm.xlu0 %456, %v387
    %v458 = vpop.permute.xlu0 %457
    %461 = vset.pattern.permute.xlu0 0
    %462 = vperm.xlu0 %461, %v388
    %v463 = vpop.permute.xlu0 %462
    %466 = vset.pattern.permute.xlu0 0
    %467 = vperm.xlu0 %466, %v389
    %v468 = vpop.permute.xlu0 %467
    %v486 = vunpack.c.l.b16 %v350
    %v487 = vunpack.c.l.b16 %v351
    %v488 = vunpack.c.l.b16 %v352
    %v489 = vunpack.c.l.b16 %v353
    %v490 = vunpack.c.l.b16 %v354
    %v491 = vunpack.c.l.b16 %v355
    %v492 = vunpack.c.l.b16 %v356
    %v493 = vunpack.c.l.b16 %v357
    %v494 = vunpack.c.l.b16 %v358
    %v495 = vunpack.c.l.b16 %v359
    %v496 = vunpack.c.l.b16 %v360
    %v497 = vunpack.c.l.b16 %v361
    %v498 = vunpack.c.l.b16 %v362
    %v499 = vunpack.c.l.b16 %v363
    %v500 = vunpack.c.l.b16 %v364
    %v501 = vunpack.c.l.b16 %v365
    %v502 = vpack.c.b16 %v487, %v486
    %v503 = vpack.c.b16 %v489, %v488
    %v504 = vpack.c.b16 %v491, %v490
    %v505 = vpack.c.b16 %v493, %v492
    %v506 = vpack.c.b16 %v495, %v494
    %v507 = vpack.c.b16 %v497, %v496
    %v508 = vpack.c.b16 %v499, %v498
    %v509 = vpack.c.b16 %v501, %v500
    %518 = vmatprep.subr.bf16.mxu0 0
    %519 = vmatpush1.bf16.msra.mxu0 %v373
    %520 = vmatprep.subr.bf16.mxu0 0
    %521 = vmatpush1.bf16.msra.mxu0 %v372
    %522 = vmatprep.subr.bf16.mxu0 0
    %523 = vmatpush1.bf16.msra.mxu0 %v371
    %524 = vmatprep.subr.bf16.mxu0 0
    %525 = vmatpush1.bf16.msra.mxu0 %v370
    %526 = vmatprep.subr.bf16.mxu0 0
    %527 = vmatpush1.bf16.msra.mxu0 %v369
    %528 = vmatprep.subr.bf16.mxu0 0
    %529 = vmatpush1.bf16.msra.mxu0 %v368
    %530 = vmatprep.subr.bf16.mxu0 0
    %531 = vmatpush1.bf16.msra.mxu0 %v367
    %532 = vmatprep.subr.bf16.mxu0 0
    %533 = vmatpush1.bf16.msra.mxu0 %v366
    %534 = vmatprep.subr.bf16.mxu0 0
    %535 = vmatpush2.bf16.msra.mxu0 0
    %536 = vmatprep.subr.bf16.mxu0 0
    %537 = vmatpush2.bf16.msra.mxu0 0
    %538 = vmatprep.subr.bf16.mxu0 0
    %539 = vmatpush2.bf16.msra.mxu0 0
    %540 = vmatprep.subr.bf16.mxu0 0
    %541 = vmatpush2.bf16.msra.mxu0 0
    %542 = vmatprep.subr.bf16.mxu0 0
    %543 = vmatpush2.bf16.msra.mxu0 0
    %544 = vmatprep.subr.bf16.mxu0 0
    %545 = vmatpush2.bf16.msra.mxu0 0
    %546 = vmatprep.subr.bf16.mxu0 0
    %547 = vmatpush2.bf16.msra.mxu0 0
    %548 = vmatprep.subr.bf16.mxu0 0
    %549 = vmatpush2.bf16.msra.mxu0 0
    %550 = vmatprep.mubr.bf16.mxu0 0
    %551 = vmatmul.mubr.bf16.gmra.mxu0 %v502
    %v552 = vpop.f32.mrf.mxu0
    %v553 = vadd.f32 %v393, %v552
    %v554 = vpop.f32.mrf.mxu0
    %v555 = vpop.f32.mrf.mxu0
    %v556 = vadd.f32 %v398, %v555
    %v557 = vpop.f32.mrf.mxu0
    %558 = vmatprep.mubr.bf16.mxu0 0
    %559 = vmatmul.mubr.bf16.gmra.mxu0 %v503
    %v560 = vpop.f32.mrf.mxu0
    %v561 = vadd.f32 %v403, %v560
    %v562 = vpop.f32.mrf.mxu0
    %v563 = vpop.f32.mrf.mxu0
    %v564 = vadd.f32 %v408, %v563
    %v565 = vpop.f32.mrf.mxu0
    %566 = vmatprep.mubr.bf16.mxu0 0
    %567 = vmatmul.mubr.bf16.gmra.mxu0 %v504
    %v568 = vpop.f32.mrf.mxu0
    %v569 = vadd.f32 %v413, %v568
    %v570 = vpop.f32.mrf.mxu0
    %v571 = vpop.f32.mrf.mxu0
    %v572 = vadd.f32 %v418, %v571
    %v573 = vpop.f32.mrf.mxu0
    %574 = vmatprep.mubr.bf16.mxu0 0
    %575 = vmatmul.mubr.bf16.gmra.mxu0 %v505
    %v576 = vpop.f32.mrf.mxu0
    %v577 = vadd.f32 %v423, %v576
    %v578 = vpop.f32.mrf.mxu0
    %v579 = vpop.f32.mrf.mxu0
    %v580 = vadd.f32 %v428, %v579
    %v581 = vpop.f32.mrf.mxu0
    %582 = vmatprep.mubr.bf16.mxu0 0
    %583 = vmatmul.mubr.bf16.gmra.mxu0 %v506
    %v584 = vpop.f32.mrf.mxu0
    %v585 = vadd.f32 %v433, %v584
    %v586 = vpop.f32.mrf.mxu0
    %v587 = vpop.f32.mrf.mxu0
    %v588 = vadd.f32 %v438, %v587
    %v589 = vpop.f32.mrf.mxu0
    %590 = vmatprep.mubr.bf16.mxu0 0
    %591 = vmatmul.mubr.bf16.gmra.mxu0 %v507
    %v592 = vpop.f32.mrf.mxu0
    %v593 = vadd.f32 %v443, %v592
    %v594 = vpop.f32.mrf.mxu0
    %v595 = vpop.f32.mrf.mxu0
    %v596 = vadd.f32 %v448, %v595
    %v597 = vpop.f32.mrf.mxu0
    %598 = vmatprep.mubr.bf16.mxu0 0
    %599 = vmatmul.mubr.bf16.gmra.mxu0 %v508
    %v600 = vpop.f32.mrf.mxu0
    %v601 = vadd.f32 %v453, %v600
    %v602 = vpop.f32.mrf.mxu0
    %v603 = vpop.f32.mrf.mxu0
    %v604 = vadd.f32 %v458, %v603
    %v605 = vpop.f32.mrf.mxu0
    %606 = vmatprep.mubr.bf16.mxu0 0
    %607 = vmatmul.mubr.bf16.gmra.mxu0 %v509
    %v608 = vpop.f32.mrf.mxu0
    %v609 = vadd.f32 %v463, %v608
    %v610 = vpop.f32.mrf.mxu0
    %v611 = vpop.f32.mrf.mxu0
    %v612 = vadd.f32 %v468, %v611
    %v613 = vpop.f32.mrf.mxu0
    %614 = vdwg.mxu0
    %v615 = vmax.f32 %v553, 0.0
    %v616 = vmax.f32 %v556, 0.0
    %v617 = vmax.f32 %v561, 0.0
    %v618 = vmax.f32 %v564, 0.0
    %v619 = vmax.f32 %v569, 0.0
    %v620 = vmax.f32 %v572, 0.0
    %v621 = vmax.f32 %v577, 0.0
    %v622 = vmax.f32 %v580, 0.0
    %v623 = vmax.f32 %v585, 0.0
    %v624 = vmax.f32 %v588, 0.0
    %v625 = vmax.f32 %v593, 0.0
    %v626 = vmax.f32 %v596, 0.0
    %v627 = vmax.f32 %v601, 0.0
    %v628 = vmax.f32 %v604, 0.0
    %v629 = vmax.f32 %v609, 0.0
    %v630 = vmax.f32 %v612, 0.0
    %v631 = vld [vmem:[%s5] sm:$0xf]
    %v632 = vpack.c.bf16 %v616, %v615
    %v633 = vpack.c.bf16 %v618, %v617
    %v634 = vpack.c.bf16 %v620, %v619
    %v635 = vpack.c.bf16 %v622, %v621
    %v636 = vpack.c.bf16 %v624, %v623
    %v637 = vpack.c.bf16 %v626, %v625
    %v638 = vpack.c.bf16 %v628, %v627
    %v639 = vpack.c.bf16 %v630, %v629
    %v640 = vld [vmem:[%s6] sm:$0xff]
    %642 = vset.pattern.permute.xlu0 0
    %643 = vperm.xlu0 %642, %v640
    %v644 = vpop.permute.xlu0 %643
    %646 = vmatprep.subr.bf16.mxu0 0
    %647 = vmatpush1.bf16.msra.mxu0 %v639
    %648 = vmatprep.subr.bf16.mxu0 0
    %649 = vmatpush1.bf16.msra.mxu0 %v638
    %650 = vmatprep.subr.bf16.mxu0 0
    %651 = vmatpush1.bf16.msra.mxu0 %v637
    %652 = vmatprep.subr.bf16.mxu0 0
    %653 = vmatpush1.bf16.msra.mxu0 %v636
    %654 = vmatprep.subr.bf16.mxu0 0
    %655 = vmatpush1.bf16.msra.mxu0 %v635
    %656 = vmatprep.subr.bf16.mxu0 0
    %657 = vmatpush1.bf16.msra.mxu0 %v634
    %658 = vmatprep.subr.bf16.mxu0 0
    %659 = vmatpush1.bf16.msra.mxu0 %v633
    %660 = vmatprep.subr.bf16.mxu0 0
    %661 = vmatpush1.bf16.msra.mxu0 %v632
    %662 = vmatprep.subr.bf16.mxu0 0
    %663 = vmatpush2.bf16.msra.mxu0 0
    %664 = vmatprep.subr.bf16.mxu0 0
    %665 = vmatpush2.bf16.msra.mxu0 0
    %666 = vmatprep.subr.bf16.mxu0 0
    %667 = vmatpush2.bf16.msra.mxu0 0
    %668 = vmatprep.subr.bf16.mxu0 0
    %669 = vmatpush2.bf16.msra.mxu0 0
    %670 = vmatprep.subr.bf16.mxu0 0
    %671 = vmatpush2.bf16.msra.mxu0 0
    %672 = vmatprep.subr.bf16.mxu0 0
    %673 = vmatpush2.bf16.msra.mxu0 0
    %674 = vmatprep.subr.bf16.mxu0 0
    %675 = vmatpush2.bf16.msra.mxu0 0
    %676 = vmatprep.subr.bf16.mxu0 0
    %677 = vmatpush2.bf16.msra.mxu0 0
    %678 = vmatprep.mubr.bf16.mxu0 0
    %679 = vmatmul.mubr.bf16.gmra.mxu0 %v631
    %v680 = vpop.f32.mrf.mxu0
    %v681 = vadd.f32 %v644, %v680
    %v682 = vpop.f32.mrf.mxu0
    %v683 = vpop.f32.mrf.mxu0
    %v684 = vpop.f32.mrf.mxu0
    %685 = vdwg.mxu0
    %686 = vst [vmem:[#allocation2] sm:$0xff] %v681
    // Predicated region
    $region30: #{tpu_custom_call.1} parent=1 // pred_check
      _
    $region31: #{tpu_custom_call.1} parent=1 // pred_check_branch
      %688 = sbr.rel (0) target = $region33
    $region32: #{tpu_custom_call.1} parent=1 // pred_region
      %s690 = ssub.s32 128, 128
      %691 = vsyncadd [#allocation3], %s690
      %s693 = sshll.u32 [#allocation2], 4
      %s694 = int_to_ptr.vmem [resolvable:$true] %s693
      %696 = dma.vmem_to_hbm [thread:$0]  %s694, 128, %s7, [#allocation3]
    $region33: #{tpu_custom_call.1} parent=1 // pred_fallthru
      _
    // Predicated region
    $region34: #{tpu_custom_call.1} parent=1 // pred_check
      _
    $region35: #{tpu_custom_call.1} parent=1 // pred_check_branch
      %698 = sbr.rel (0) target = $region37
    $region36: #{tpu_custom_call.1} parent=1 // pred_region
      %699 = dma.done [#allocation3], 128
    $region37: #{tpu_custom_call.1} parent=1 // pred_fallthru
      _
    %700 = vsyncpa [#allocation3], 1

</llo_original>
